<compile_context>
chip_gen: v6e
topology: v6e:2x2x1
jax: 0.10.0
libtpu: 0.0.40
codegen_flags: <defaults>
</compile_context>

<pallas_src>
import math
import functools

import jax
import jax.numpy as jnp
from jax.experimental import pallas as pl
from jax.experimental.pallas import tpu as pltpu


# -----------------------------------------------------------------------------
# helpers
# -----------------------------------------------------------------------------
def _pick_tile(dim, target, quantum):
    """Largest multiple of `quantum` that divides `dim` and is <= target.
    Falls back to the full dimension (always a legal Pallas block)."""
    if dim <= target:
        return dim
    t = (target // quantum) * quantum
    while t >= quantum:
        if dim % t == 0:
            return t
        t -= quantum
    # TODO(synk): for large prime-ish dims prefer padding to a tile multiple over
    # the full-dim fallback (full-dim blocks can exceed VMEM on v7x).
    return dim


_VMEM_LIMIT = 32 * 1024 * 1024  # safe on v5e/v6e/v7x; tiles below are budgeted under it


# -----------------------------------------------------------------------------
# Pallas kernels
# -----------------------------------------------------------------------------
def _matmul_kernel(x_ref, w_ref, b_ref, o_ref, acc_ref, *, activation):
    """Tiled y = x @ w + b (optionally ReLU); bf16 MXU operands, f32 accumulation."""
    k = pl.program_id(2)

    @pl.when(k == 0)
    def _():
        acc_ref[...] = jnp.zeros_like(acc_ref)

    acc_ref[...] += jnp.dot(x_ref[...].astype(jnp.bfloat16),
                            w_ref[...].astype(jnp.bfloat16),
                            preferred_element_type=jnp.float32)

    @pl.when(k == pl.num_programs(2) - 1)
    def _():
        y = acc_ref[...] + b_ref[...].astype(jnp.float32)
        if activation == "relu":
            y = jnp.maximum(y, 0.0)
        o_ref[...] = y.astype(o_ref.dtype)


def linear(x, w, b, activation=None, *, tm=512, tn=1024, tk=512):
    """y = x @ w + b (optionally ReLU).  w stored [in, out].  Fully tiled."""
    M, K = x.shape
    N = w.shape[1]
    tm = _pick_tile(M, tm, 8)
    tn = _pick_tile(N, tn, 128)
    tk = _pick_tile(K, tk, 128)
    # Keep >=2 steps on a parallel axis so the v7x megacore can split the grid.
    if M // tm == 1 and N // tn == 1 and tm % 16 == 0:
        tm //= 2
    grid = (M // tm, N // tn, K // tk)
    # TODO(synk): on v7x, fp8-quantized decoder/FFN weights (per-channel scales in
    # the epilogue) would halve weight DMA and ~double MXU rate for those GEMMs.
    return pl.pallas_call(
        functools.partial(_matmul_kernel, activation=activation),
        out_shape=jax.ShapeDtypeStruct((M, N), x.dtype),
        grid=grid,
        in_specs=[
            pl.BlockSpec((tm, tk), lambda i, j, k: (i, k)),
            pl.BlockSpec((tk, tn), lambda i, j, k: (k, j)),
            pl.BlockSpec((1, tn), lambda i, j, k: (0, j)),
        ],
        out_specs=pl.BlockSpec((tm, tn), lambda i, j, k: (i, j)),
        scratch_shapes=[pltpu.VMEM((tm, tn), jnp.float32)],
        compiler_params=pltpu.CompilerParams(
            dimension_semantics=("parallel", "parallel", "arbitrary"),
            vmem_limit_bytes=_VMEM_LIMIT),
    )(x, w, b.reshape(1, N))


def _matmul_add_ln_kernel(x_ref, w_ref, b_ref, r_ref, g_ref, bt_ref,
                          o_ref, acc_ref, *, eps):
    """Fused: LayerNorm(residual + x @ w + b) * gamma + beta.
    Tiled over rows (parallel) and K (arbitrary); epilogue on last K step."""
    k = pl.program_id(1)

    @pl.when(k == 0)
    def _():
        acc_ref[...] = jnp.zeros_like(acc_ref)

    acc_ref[...] += jnp.dot(x_ref[...].astype(jnp.bfloat16),
                            w_ref[...].astype(jnp.bfloat16),
                            preferred_element_type=jnp.float32)

    @pl.when(k == pl.num_programs(1) - 1)
    def _():
        y = (acc_ref[...] + b_ref[...].astype(jnp.float32)
             + r_ref[...].astype(jnp.float32))
        mu = jnp.mean(y, axis=-1, keepdims=True)
        var = jnp.mean((y - mu) ** 2, axis=-1, keepdims=True)
        y = (y - mu) * jax.lax.rsqrt(var + eps)
        o_ref[...] = (y * g_ref[...].astype(jnp.float32)
                      + bt_ref[...].astype(jnp.float32)).astype(o_ref.dtype)


def linear_residual_layernorm(x, w, b, residual, gamma, beta, *,
                              eps=1e-5, tm=256, tk=512):
    """LayerNorm(residual + x @ w + b).  Output dim (d_model) kept whole so the
    normalization can run in the matmul epilogue."""
    M, K = x.shape
    N = w.shape[1]
    tm = _pick_tile(M, tm, 8)
    tk = _pick_tile(K, tk, 128)
    if M // tm == 1 and tm % 16 == 0:
        tm //= 2          # keep >=2 parallel grid steps for the v7x megacore
    grid = (M // tm, K // tk)
    # TODO(synk): for d_model >= 2048 drop tm to 128 to keep the (tm,N) f32
    # accumulator + residual + output tiles inside v7x's 64 MiB VMEM.
    return pl.pallas_call(
        functools.partial(_matmul_add_ln_kernel, eps=eps),
        out_shape=jax.ShapeDtypeStruct((M, N), x.dtype),
        grid=grid,
        in_specs=[
            pl.BlockSpec((tm, tk), lambda i, k: (i, k)),
            pl.BlockSpec((tk, N), lambda i, k: (k, 0)),
            pl.BlockSpec((1, N), lambda i, k: (0, 0)),
            pl.BlockSpec((tm, N), lambda i, k: (i, 0)),   # residual (resident over k)
            pl.BlockSpec((1, N), lambda i, k: (0, 0)),    # gamma
            pl.BlockSpec((1, N), lambda i, k: (0, 0)),    # beta
        ],
        out_specs=pl.BlockSpec((tm, N), lambda i, k: (i, 0)),
        scratch_shapes=[pltpu.VMEM((tm, N), jnp.float32)],
        compiler_params=pltpu.CompilerParams(
            dimension_semantics=("parallel", "arbitrary"),
            vmem_limit_bytes=_VMEM_LIMIT),
    )(x, w, b.reshape(1, N), residual, gamma.reshape(1, N), beta.reshape(1, N))


def _attn_kernel(qkv_ref, o_ref, *, scale, nhead):
    # qkv_ref: [S, 3, H, dh] (one batch element, B squeezed); o_ref: [S, H, dh].
    for h in range(nhead):
        q = qkv_ref[:, 0, h, :].astype(jnp.float32) * scale   # fold scale into q
        k = qkv_ref[:, 1, h, :]
        v = qkv_ref[:, 2, h, :]
        s = jax.lax.dot_general(q.astype(jnp.bfloat16), k.astype(jnp.bfloat16),
                                (((1,), (1,)), ((), ())),
                                preferred_element_type=jnp.float32)   # q @ k.T
        s = s - jnp.max(s, axis=-1, keepdims=True)
        p = jnp.exp(s)
        denom = jnp.sum(p, axis=-1, keepdims=True)
        p = p * pl.reciprocal(denom, approx=True)               # EUP, not VALU divide
        o = jnp.dot(p.astype(jnp.bfloat16), v.astype(jnp.bfloat16),
                    preferred_element_type=jnp.float32)
        o_ref[:, h, :] = o.astype(o_ref.dtype)


def _attn_mask_kernel(qkv_ref, m_ref, o_ref, *, scale, nhead):
    for h in range(nhead):
        q = qkv_ref[:, 0, h, :].astype(jnp.float32) * scale
        k = qkv_ref[:, 1, h, :]
        v = qkv_ref[:, 2, h, :]
        s = jax.lax.dot_general(q.astype(jnp.bfloat16), k.astype(jnp.bfloat16),
                                (((1,), (1,)), ((), ())),
                                preferred_element_type=jnp.float32)
        s = s + m_ref[...]                                      # additive [S,S] mask
        s = s - jnp.max(s, axis=-1, keepdims=True)
        p = jnp.exp(s)
        denom = jnp.sum(p, axis=-1, keepdims=True)
        p = p * pl.reciprocal(denom, approx=True)
        o = jnp.dot(p.astype(jnp.bfloat16), v.astype(jnp.bfloat16),
                    preferred_element_type=jnp.float32)
        o_ref[:, h, :] = o.astype(o_ref.dtype)


def fused_multihead_attention(qkv, scale, mask=None):
    """qkv: [S, B, 3, H, dh] (free reshape of the in-projection output [S*B, 3D]).
    Returns attention output [S, B, H, dh] in token order, so the following
    reshape to [S*B, D] is free (no XLA transpose round trips through HBM)."""
    S, B, _, H, dh = qkv.shape
    qkv_spec = pl.BlockSpec((S, None, 3, H, dh), lambda b: (0, b, 0, 0, 0))
    out_spec = pl.BlockSpec((S, None, H, dh), lambda b: (0, b, 0, 0))
    # TODO(synk): for long sequences switch to a flash-style online-softmax with a
    # KV grid axis instead of materializing the full [S,S] scores per head.
    # TODO(synk): when B == 1 the parallel grid collapses to one step (half a v7x
    # chip idle); split heads onto a second grid axis in that case.
    if mask is None:
        kern = functools.partial(_attn_kernel, scale=scale, nhead=H)
        in_specs = [qkv_spec]
        args = (qkv,)
    else:
        kern = functools.partial(_attn_mask_kernel, scale=scale, nhead=H)
        in_specs = [qkv_spec, pl.BlockSpec((S, S), lambda b: (0, 0))]
        args = (qkv, mask.astype(jnp.float32))
    return pl.pallas_call(
        kern,
        out_shape=jax.ShapeDtypeStruct((S, B, H, dh), qkv.dtype),
        grid=(B,),
        in_specs=in_specs,
        out_specs=out_spec,
        compiler_params=pltpu.CompilerParams(dimension_semantics=("parallel",)),
    )(*args)


# -----------------------------------------------------------------------------
# Model glue (parameter setup, reshapes) in plain JAX
# -----------------------------------------------------------------------------
def make_positional_encoding(d_model, max_len=5000):
    position = jnp.arange(max_len, dtype=jnp.float32)[:, None]
    div_term = jnp.exp(jnp.arange(0, d_model, 2, dtype=jnp.float32)
                       * (-math.log(10000.0) / d_model))
    pe = jnp.zeros((max_len, 1, d_model), dtype=jnp.float32)
    pe = pe.at[:, 0, 0::2].set(jnp.sin(position * div_term))
    pe = pe.at[:, 0, 1::2].set(jnp.cos(position * div_term))
    return pe


def init_params(key, ntoken, d_model, nhead, d_hid, nlayers):
    keys = jax.random.split(key, 4 + nlayers)
    k = iter(keys)
    ntoken_pad = ((ntoken + 127) // 128) * 128   # lane-dense decoder output
    emb = jax.random.uniform(next(k), (ntoken, d_model), jnp.float32, -0.1, 0.1)
    dec_w = jax.random.uniform(next(k), (d_model, ntoken), jnp.float32, -0.1, 0.1)
    dec_b = jnp.zeros((ntoken,), jnp.float32)
    params = {
        "ntoken": ntoken,
        "ntoken_pad": ntoken_pad,
        "d_model": d_model,
        "nhead": nhead,
        "emb": emb,
        "pe": make_positional_encoding(d_model),
        # decoder weight stored [in, out]; padded copy for the lane-dense kernel
        "dec_w": dec_w,
        "dec_b": dec_b,
        "dec_w_pad": jnp.pad(dec_w, ((0, 0), (0, ntoken_pad - ntoken))),
        "dec_b_pad": jnp.pad(dec_b, (0, ntoken_pad - ntoken)),
        "layers": [],
    }
    for _ in range(nlayers):
        lk = jax.random.split(next(k), 4)
        scale_d = 1.0 / math.sqrt(d_model)
        scale_h = 1.0 / math.sqrt(d_hid)
        layer = {
            # MultiheadAttention in-projection stored [d_model, 3*d_model] ([in, out])
            "in_w": jax.random.normal(lk[0], (d_model, 3 * d_model), jnp.float32) * scale_d,
            "in_b": jnp.zeros((3 * d_model,), jnp.float32),
            "out_w": jax.random.normal(lk[1], (d_model, d_model), jnp.float32) * scale_d,
            "out_b": jnp.zeros((d_model,), jnp.float32),
            # FFN
            "w1": jax.random.normal(lk[2], (d_model, d_hid), jnp.float32) * scale_d,
            "b1": jnp.zeros((d_hid,), jnp.float32),
            "w2": jax.random.normal(lk[3], (d_hid, d_model), jnp.float32) * scale_h,
            "b2": jnp.zeros((d_model,), jnp.float32),
            # LayerNorms
            "ln1_g": jnp.ones((d_model,), jnp.float32),
            "ln1_b": jnp.zeros((d_model,), jnp.float32),
            "ln2_g": jnp.ones((d_model,), jnp.float32),
            "ln2_b": jnp.zeros((d_model,), jnp.float32),
        }
        params["layers"].append(layer)
    return params


def encoder_layer_forward(x, layer, nhead, src_mask):
    # x: [S, B, D]  (post-norm TransformerEncoderLayer, ReLU activation)
    S, B, D = x.shape
    dh = D // nhead
    xf = x.reshape(S * B, D)

    # --- self-attention block ---
    qkv = linear(xf, layer["in_w"], layer["in_b"])            # tiled, [S*B, 3D]
    qkv = qkv.reshape(S, B, 3, nhead, dh)                     # free reshape, no transpose
    attn = fused_multihead_attention(qkv, 1.0 / math.sqrt(dh), mask=src_mask)
    attn = attn.reshape(S * B, D)                             # free reshape (token order)

    # out-proj + residual + LayerNorm1 fused into one kernel: norm1(x + sa(x))
    x1 = linear_residual_layernorm(attn, layer["out_w"], layer["out_b"],
                                   xf, layer["ln1_g"], layer["ln1_b"])

    # --- feed-forward block ---
    h = linear(x1, layer["w1"], layer["b1"], activation="relu")   # tiled, fused ReLU
    # w2 + residual + LayerNorm2 fused: norm2(x + ff(x))
    x2 = linear_residual_layernorm(h, layer["w2"], layer["b2"],
                                   x1, layer["ln2_g"], layer["ln2_b"])

    return x2.reshape(S, B, D)


def transformer_forward(params, src, src_mask=None):
    """src: [seq_len, batch] int tokens -> [seq_len, batch, ntoken]."""
    S, B = src.shape
    D = params["d_model"]
    # embedding gather + scale + positional encoding (glue; dropout = identity)
    x = jnp.take(params["emb"], src, axis=0) * math.sqrt(D)   # [S, B, D]
    x = x + params["pe"][:S]                                  # pe: [S, 1, D] broadcast
    for layer in params["layers"]:
        x = encoder_layer_forward(x, layer, params["nhead"], src_mask)
    # decoder GEMM on the 128-padded vocab (lane-dense stores), slice afterwards
    out = linear(x.reshape(S * B, D), params["dec_w_pad"], params["dec_b_pad"])
    out = out[:, :params["ntoken"]]
    return out.reshape(S, B, params["ntoken"])
    # TODO(synk): src_key_padding_mask is not implemented.
    # TODO(synk): padding d_model to a lane-dense multiple of 128 would also help
    # the intermediate activations but changes the parameter shapes.


# -----------------------------------------------------------------------------
# Pure-JAX f32 reference (for a loose numerical check of the bf16-MXU Pallas path)
# -----------------------------------------------------------------------------
def _ln_ref(x, g, b, eps=1e-5):
    mu = jnp.mean(x, axis=-1, keepdims=True)
    var = jnp.mean((x - mu) ** 2, axis=-1, keepdims=True)
    return (x - mu) * jax.lax.rsqrt(var + eps) * g + b


def reference_forward(params, src, src_mask=None):
    S, B = src.shape
    D, H = params["d_model"], params["nhead"]
    dh = D // H
    x = jnp.take(params["emb"], src, axis=0) * math.sqrt(D)
    x = x + params["pe"][:S]
    for layer in params["layers"]:
        xf = x.reshape(S * B, D)
        qkv = xf @ layer["in_w"] + layer["in_b"]
        qkv = qkv.reshape(S, B, 3, H, dh).transpose(2, 1, 3, 0, 4)  # [3,B,H,S,dh]
        q, k, v = qkv[0], qkv[1], qkv[2]
        s = jnp.einsum("bhqd,bhkd->bhqk", q, k) / math.sqrt(dh)
        if src_mask is not None:
            s = s + src_mask
        p = jax.nn.softmax(s, axis=-1)
        a = jnp.einsum("bhqk,bhkd->bhqd", p, v)
        a = a.transpose(2, 0, 1, 3).reshape(S * B, D)
        a = a @ layer["out_w"] + layer["out_b"]
        x1 = _ln_ref(xf + a, layer["ln1_g"], layer["ln1_b"])
        h = jax.nn.relu(x1 @ layer["w1"] + layer["b1"])
        x2 = _ln_ref(x1 + h @ layer["w2"] + layer["b2"],
                     layer["ln2_g"], layer["ln2_b"])
        x = x2.reshape(S, B, D)
    out = x.reshape(S * B, D) @ params["dec_w"] + params["dec_b"]
    return out.reshape(S, B, params["ntoken"])


if __name__ == "__main__":
    ntoken, d_model, nhead, d_hid, nlayers = 50, 32, 4, 64, 2
    seq_len, batch = 8, 2

    key = jax.random.PRNGKey(0)
    pkey, skey = jax.random.split(key)
    params = init_params(pkey, ntoken, d_model, nhead, d_hid, nlayers)
    src = jax.random.randint(skey, (seq_len, batch), 0, ntoken, dtype=jnp.int32)

    # tolerance is loose because MXU operands run in bf16 (f32 accumulation)
    TOL = 1e-1

    # no-mask path
    out = jax.block_until_ready(transformer_forward(params, src))
    assert out.shape == (seq_len, batch, ntoken)
    assert bool(jnp.all(jnp.isfinite(out)))
    ref = reference_forward(params, src)
    assert bool(jnp.max(jnp.abs(out - ref)) < TOL), "mismatch vs reference (no mask)"

    # additive (causal) mask path
    causal = jnp.where(jnp.arange(seq_len)[:, None] >= jnp.arange(seq_len)[None, :],
                       0.0, -1e9).astype(jnp.float32)
    out_m = jax.block_until_ready(transformer_forward(params, src, src_mask=causal))
    assert out_m.shape == (seq_len, batch, ntoken)
    assert bool(jnp.all(jnp.isfinite(out_m)))
    ref_m = reference_forward(params, src, src_mask=causal)
    assert bool(jnp.max(jnp.abs(out_m - ref_m)) < TOL), "mismatch vs reference (mask)"

    print("KERNEL_OK")
</pallas_src>

<mosaic_0001>
module attributes {stable_mosaic.version = 11 : i64} {
  func.func @_matmul_kernel(%arg0: i32, %arg1: i32, %arg2: i32, %arg3: memref<8x32xf32, #tpu.memory_space<vmem>>, %arg4: memref<32x96xf32, #tpu.memory_space<vmem>>, %arg5: memref<1x96xf32, #tpu.memory_space<vmem>>, %arg6: memref<8x96xf32, #tpu.memory_space<vmem>>, %arg7: memref<8x96xf32, #tpu.memory_space<vmem>>) attributes {dimension_semantics = [#tpu.dimension_semantics<parallel>, #tpu.dimension_semantics<parallel>, #tpu.dimension_semantics<arbitrary>], iteration_bounds = array<i64: 2, 1, 1>, scalar_prefetch = 0 : i64, scratch_operands = 1 : i64, tpu.core_type = #tpu.core_type<tc>, window_params = [{transform_indices = @transform_0, window_bounds = array<i64: 8, 32>}, {transform_indices = @transform_1, window_bounds = array<i64: 32, 96>}, {transform_indices = @transform_2, window_bounds = array<i64: 1, 96>}, {transform_indices = @transform_3, window_bounds = array<i64: 8, 96>}]} {
    %c0_i32 = arith.constant 0 : i32
    %0 = arith.cmpi eq, %arg2, %c0_i32 : i32
    %1 = arith.extui %0 : i1 to i32
    %c0_i32_0 = arith.constant 0 : i32
    %2 = arith.cmpi ne, %1, %c0_i32_0 : i32
    scf.if %2 {
      %cst_10 = arith.constant 0.000000e+00 : f32
      %14 = vector.broadcast %cst_10 : f32 to vector<8x96xf32>
      %c0_11 = arith.constant 0 : index
      %c0_12 = arith.constant 0 : index
      %15 = vector.load %arg7[%c0_11, %c0_12] : memref<8x96xf32, #tpu.memory_space<vmem>>, vector<8x96xf32>
      tpu.vector_store %arg7[%c0_11, %c0_12], %14 {strides = array<i32>} : memref<8x96xf32, #tpu.memory_space<vmem>>, vector<8x96xf32>,
    } else {
    }
    %c0 = arith.constant 0 : index
    %c0_1 = arith.constant 0 : index
    %3 = vector.load %arg7[%c0, %c0_1] : memref<8x96xf32, #tpu.memory_space<vmem>>, vector<8x96xf32>
    %c0_2 = arith.constant 0 : index
    %c0_3 = arith.constant 0 : index
    %4 = vector.load %arg3[%c0_2, %c0_3] : memref<8x32xf32, #tpu.memory_space<vmem>>, vector<8x32xf32>
    %5 = arith.truncf %4 : vector<8x32xf32> to vector<8x32xbf16>
    %c0_4 = arith.constant 0 : index
    %c0_5 = arith.constant 0 : index
    %6 = vector.load %arg4[%c0_4, %c0_5] : memref<32x96xf32, #tpu.memory_space<vmem>>, vector<32x96xf32>
    %7 = arith.truncf %6 : vector<32x96xf32> to vector<32x96xbf16>
    %cst = arith.constant dense<0.000000e+00> : vector<8x96xf32>
    %8 = tpu.matmul %5, %7, %cst {dimension_numbers = #tpu.dot_dimension_numbers<[1], [0], [0], [1], [0, 0, 1, 1], [], []>} : vector<8x32xbf16>, vector<32x96xbf16>, vector<8x96xf32> -> vector<8x96xf32>
    %9 = arith.addf %3, %8 : vector<8x96xf32>
    %c0_6 = arith.constant 0 : index
    %c0_7 = arith.constant 0 : index
    %10 = vector.load %arg7[%c0_6, %c0_7] : memref<8x96xf32, #tpu.memory_space<vmem>>, vector<8x96xf32>
    tpu.vector_store %arg7[%c0_6, %c0_7], %9 {strides = array<i32>} : memref<8x96xf32, #tpu.memory_space<vmem>>, vector<8x96xf32>,
    %c0_i32_8 = arith.constant 0 : i32
    %11 = arith.cmpi eq, %arg2, %c0_i32_8 : i32
    %12 = arith.extui %11 : i1 to i32
    %c0_i32_9 = arith.constant 0 : i32
    %13 = arith.cmpi ne, %12, %c0_i32_9 : i32
    scf.if %13 {
      %c0_10 = arith.constant 0 : index
      %c0_11 = arith.constant 0 : index
      %14 = vector.load %arg7[%c0_10, %c0_11] : memref<8x96xf32, #tpu.memory_space<vmem>>, vector<8x96xf32>
      %c0_12 = arith.constant 0 : index
      %c0_13 = arith.constant 0 : index
      %15 = vector.load %arg5[%c0_12, %c0_13] : memref<1x96xf32, #tpu.memory_space<vmem>>, vector<1x96xf32>
      %16 = vector.broadcast %15 : vector<1x96xf32> to vector<8x96xf32>
      %17 = arith.addf %14, %16 : vector<8x96xf32>
      %c0_14 = arith.constant 0 : index
      %c0_15 = arith.constant 0 : index
      %18 = vector.load %arg6[%c0_14, %c0_15] : memref<8x96xf32, #tpu.memory_space<vmem>>, vector<8x96xf32>
      tpu.vector_store %arg6[%c0_14, %c0_15], %17 {strides = array<i32>} : memref<8x96xf32, #tpu.memory_space<vmem>>, vector<8x96xf32>,
    } else {
    }
    return
  }
  func.func @transform_0(%arg0: i32, %arg1: i32, %arg2: i32) -> (i32, i32) {
    %c0_i32 = arith.constant 0 : i32
    return %arg0, %arg2 : i32, i32
  }
  func.func @transform_1(%arg0: i32, %arg1: i32, %arg2: i32) -> (i32, i32) {
    %c0_i32 = arith.constant 0 : i32
    return %arg2, %arg1 : i32, i32
  }
  func.func @transform_2(%arg0: i32, %arg1: i32, %arg2: i32) -> (i32, i32) {
    %c0_i32 = arith.constant 0 : i32
    %c0_i32_0 = arith.constant 0 : i32
    return %c0_i32, %arg1 : i32, i32
  }
  func.func @transform_3(%arg0: i32, %arg1: i32, %arg2: i32) -> (i32, i32) {
    %c0_i32 = arith.constant 0 : i32
    return %arg0, %arg1 : i32, i32
  }
}

</mosaic_0001>

<llo_original>
// kernel: tpu_custom_call.1
$region0: #{tpu_custom_call.1}
  #allocation0 [shape = 'u32[]', space=smem, size = 0x4, offset = 0x4, fixed_abs, tag = 'smem constant byte address 0x4 - core index']
  #allocation1 [shape = 'u32[144,128]{1,0:T(1,128)}', space=vmem, size = 0x12000, scoped, tag = 'internal scratch']
  #allocation2 [shape = 'f32[8,96]{1,0:T(8,128)}', space=vmem, size = 0x1000, scoped, tag = 'scratch operand']
  %s0 = inlined_call_operand.hbm [shape: f32[16,32], index: 0, kind: input, shape index: {}]
  %s1 = inlined_call_operand.hbm [shape: f32[32,96], index: 1, kind: input, shape index: {}]
  %s2 = inlined_call_operand.vmem [shape: f32[1,96], index: 2, kind: input, shape index: {}]
  %s3 = inlined_call_operand.hbm [shape: f32[16,96], index: 3, kind: output, shape index: {}]
  %s4 = sld [smem:[#allocation0]]
  $region61: #{tpu_custom_call.1} parent=0
    _
  %s6 = ssub.s32 1, %s4
  %s7 = scalar_select 0, %s6, %s4
  $region1: #{tpu_custom_call.1} parent=0
    #allocation3 [shape = 'u8[8192]{0}', space=vmem, size = 0x2000, scoped, tag = 'input window, operand 0']
    #allocation4 [shape = 's32[2]{0}', space=sflag, size = 0x8, scoped, tag = 'scoped memory for tpu_custom_call.1']
    #allocation5 [shape = 's32[2]{0}', space=sflag, size = 0x8, scoped, tag = 'scoped memory for tpu_custom_call.1']
    #allocation6 [shape = 'u8[16384]{0}', space=vmem, size = 0x4000, scoped, tag = 'input window, operand 1, single buffered']
    #allocation7 [shape = 's32[1]{0}', space=sflag, size = 0x4, scoped, tag = 'scoped memory for tpu_custom_call.1']
    #allocation8 [shape = 'u8[8192]{0}', space=vmem, size = 0x2000, scoped, tag = 'output window, operand 0']
    %8 = vsyncpa [#allocation4], 0
    %s9 = scalar_lea.sflag [#allocation4], 1
    %10 = vsyncpa %s9, 0
    %11 = vsyncpa [#allocation7], 0
    %12 = vsyncpa [#allocation5], 0
    %s13 = scalar_lea.sflag [#allocation5], 1
    %14 = vsyncpa %s13, 0
    loop: start=0, step=1, limit=4
    $region2: #{tpu_custom_call.1} parent=1 // loop_pre_header
      _
    $region3: #{tpu_custom_call.1} parent=1 // loop_header
      %s16 = sphi 0, %s20
      %p17 = scmp.ge.s32.totalorder %s16, 4
      %s23 = sphi 0, %s42
      %s24 = sphi 0, %s38
      %s25 = sphi 0, %s34
      %s26 = sphi 0, %s23
      %s27 = sphi 0, %s24
      %s28 = sphi 0, %s25
      %s29 = sphi 0, %s26
      %s30 = sphi 0, %s27
      %s31 = sphi 0, %s28
      %s47 = sphi 0, %s49
      %s50 = sphi 0, %s47
      %s51 = sphi 0, %s50
      %s67 = sphi 0, %s51
      %s75 = sphi 0, %s77
      %s78 = sphi 0, %s75
      %s79 = sphi 0, %s78
      %s95 = sphi 0, %s79
      %s101 = sphi 0, %s103
      %s104 = sphi 0, %s101
      %s105 = sphi 0, %s104
      %s121 = sphi 0, %s105
      %s129 = sphi 0, %s131
      %s132 = sphi 0, %s129
      %s133 = sphi 0, %s132
      %s149 = sphi 0, %s133
    $region4: #{tpu_custom_call.1} parent=1 // loop_header_branch
      %19 = sbr.rel (%p17) target = $region8
    $region5: #{tpu_custom_call.1} parent=1 // loop_body
      %s21 = ssub.s32 %s16, 1
      %s22 = ssub.s32 %s16, 2
      %s32 = sadd.s32 1, %s25
      %p33 = scmp.ge.s32.totalorder %s32, 1
      %s34 = scalar_select %p33, 0, %s32
      %s35 = sadd.s32 1, %s24
      %s36 = scalar_select %p33, %s35, %s24
      %p37 = scmp.ge.s32.totalorder %s36, 1
      %s38 = scalar_select %p37, 0, %s36
      %s39 = sadd.s32 1, %s23
      %s40 = scalar_select %p37, %s39, %s23
      %p41 = scmp.ge.s32.totalorder %s40, 2
      %s42 = scalar_select %p41, 0, %s40
      %s43 = ssub.s32 %s23, %s42
      %s44 = ssub.s32 %s25, %s34
      %s45 = sor.u32 %s43, %s44
      %p46 = scmp.eq.s32.totalorder %s45, 0
      %s48 = sadd.s32 %s47, 1
      %s49 = scalar_select %p46, %s47, %s48
      %p52 = pneg %p46
      %p53 = scmp.eq.s32.totalorder %s16, 1
      %p54 = por %p52, %p53
      %p55 = scmp.ne.s32.totalorder %s47, %s50
      %p56 = scmp.eq.s32.totalorder %s16, 0
      %p57 = por %p55, %p56
      %p58 = scmp.ne.s32.totalorder %s47, %s50
      %p59 = scmp.eq.s32.totalorder %s21, 1
      %p60 = por %p58, %p59
      %p61 = scmp.ne.s32.totalorder %s50, %s51
      %p62 = scmp.eq.s32.totalorder %s21, 0
      %p63 = por %p61, %p62
      %p64 = scmp.ne.s32.totalorder %s50, %s51
      %p65 = scmp.eq.s32.totalorder %s22, 1
      %p66 = por %p64, %p65
      %p68 = scmp.ne.s32.totalorder %s51, %s67
      %p69 = scmp.eq.s32.totalorder %s22, 0
      %p70 = por %p68, %p69
      %s71 = ssub.s32 %s25, %s34
      %s72 = ssub.s32 %s24, %s38
      %s73 = sor.u32 %s71, %s72
      %p74 = scmp.eq.s32.totalorder %s73, 0
      %s76 = sadd.s32 %s75, 1
      %s77 = scalar_select %p74, %s75, %s76
      %p80 = pneg %p74
      %p81 = scmp.eq.s32.totalorder %s16, 1
      %p82 = por %p80, %p81
      %p83 = scmp.ne.s32.totalorder %s75, %s78
      %p84 = scmp.eq.s32.totalorder %s16, 0
      %p85 = por %p83, %p84
      %p86 = scmp.ne.s32.totalorder %s75, %s78
      %p87 = scmp.eq.s32.totalorder %s21, 1
      %p88 = por %p86, %p87
      %p89 = scmp.ne.s32.totalorder %s78, %s79
      %p90 = scmp.eq.s32.totalorder %s21, 0
      %p91 = por %p89, %p90
      %p92 = scmp.ne.s32.totalorder %s78, %s79
      %p93 = scmp.eq.s32.totalorder %s22, 1
      %p94 = por %p92, %p93
      %p96 = scmp.ne.s32.totalorder %s79, %s95
      %p97 = scmp.eq.s32.totalorder %s22, 0
      %p98 = por %p96, %p97
      %s99 = ssub.s32 %s24, %s38
      %p100 = scmp.eq.s32.totalorder %s99, 0
      %s102 = sadd.s32 %s101, 1
      %s103 = scalar_select %p100, %s101, %s102
      %p106 = pneg %p100
      %p107 = scmp.eq.s32.totalorder %s16, 1
      %p108 = por %p106, %p107
      %p109 = scmp.ne.s32.totalorder %s101, %s104
      %p110 = scmp.eq.s32.totalorder %s16, 0
      %p111 = por %p109, %p110
      %p112 = scmp.ne.s32.totalorder %s101, %s104
      %p113 = scmp.eq.s32.totalorder %s21, 1
      %p114 = por %p112, %p113
      %p115 = scmp.ne.s32.totalorder %s104, %s105
      %p116 = scmp.eq.s32.totalorder %s21, 0
      %p117 = por %p115, %p116
      %p118 = scmp.ne.s32.totalorder %s104, %s105
      %p119 = scmp.eq.s32.totalorder %s22, 1
      %p120 = por %p118, %p119
      %p122 = scmp.ne.s32.totalorder %s105, %s121
      %p123 = scmp.eq.s32.totalorder %s22, 0
      %p124 = por %p122, %p123
      %s125 = ssub.s32 %s23, %s42
      %s126 = ssub.s32 %s24, %s38
      %s127 = sor.u32 %s125, %s126
      %p128 = scmp.eq.s32.totalorder %s127, 0
      %s130 = sadd.s32 %s129, 1
      %s131 = scalar_select %p128, %s129, %s130
      %p134 = pneg %p128
      %p135 = scmp.eq.s32.totalorder %s16, 1
      %p136 = por %p134, %p135
      %p137 = scmp.ne.s32.totalorder %s129, %s132
      %p138 = scmp.eq.s32.totalorder %s16, 0
      %p139 = por %p137, %p138
      %p140 = scmp.ne.s32.totalorder %s129, %s132
      %p141 = scmp.eq.s32.totalorder %s21, 1
      %p142 = por %p140, %p141
      %p143 = scmp.ne.s32.totalorder %s132, %s133
      %p144 = scmp.eq.s32.totalorder %s21, 0
      %p145 = por %p143, %p144
      %p146 = scmp.ne.s32.totalorder %s132, %s133
      %p147 = scmp.eq.s32.totalorder %s22, 1
      %p148 = por %p146, %p147
      %p150 = scmp.ne.s32.totalorder %s133, %s149
      %p151 = scmp.eq.s32.totalorder %s22, 0
      %p152 = por %p150, %p151
      %p153 = scmp.le.s32.totalorder 1, %s16
      %p154 = scmp.lt.s32.totalorder %s16, 3
      %p155 = pnand %p153, %p154
      %p156 = pneg %p155
      // Predicated region
      $region9: #{tpu_custom_call.1} parent=5 // pred_check
        _
      $region10: #{tpu_custom_call.1} parent=5 // pred_check_branch
        %158 = sbr.rel (%p155) target = $region12
      $region11: #{tpu_custom_call.1} parent=5 // pred_region
        %s159 = ssub.s32 %s16, 1
        // Predicated region
        $region13: #{tpu_custom_call.1} parent=11 // pred_check
          %p160 = pneg %p91
        $region14: #{tpu_custom_call.1} parent=11 // pred_check_branch
          %162 = sbr.rel (%p160) target = $region16
        $region15: #{tpu_custom_call.1} parent=11 // pred_region
          %s163 = smul.u32 4, %s28
          %s165 = ssub.s32 512, 512
          %166 = vsyncadd [#allocation7], %s165
          %s167 = sadd.s32 %s27, %s163
          %s168 = smul.addr %s167, 128
          %s169 = scalar_lea.hbm %s1, %s168
          %s170 = sshll.u32 [#allocation6], 4
          %s171 = int_to_ptr.vmem [resolvable:$true] %s170
          %176 = dma.hbm_to_vmem [thread:$0]  %s169, 512, %s171, [#allocation7], 128, 128, 8
        $region16: #{tpu_custom_call.1} parent=11 // pred_fallthru
          _
        // Predicated region
        $region17: #{tpu_custom_call.1} parent=11 // pred_check
          %p177 = pneg %p117
        $region18: #{tpu_custom_call.1} parent=11 // pred_check_branch
          %179 = sbr.rel (%p177) target = $region20
        $region19: #{tpu_custom_call.1} parent=11 // pred_region
          %p180 = scmp.lt.s32.totalorder %s27, 0
          %s181 = scalar_select %p180, %s27, 0
          %s182 = scalar_lea.vmem %s2, %s181
        $region20: #{tpu_custom_call.1} parent=11 // pred_fallthru
          _
      $region12: #{tpu_custom_call.1} parent=5 // pred_fallthru
        _
      %p183 = scmp.lt.s32.totalorder %s16, 2
      // Predicated region
      $region21: #{tpu_custom_call.1} parent=5 // pred_check
        %p184 = pneg %p183
      $region22: #{tpu_custom_call.1} parent=5 // pred_check_branch
        %186 = sbr.rel (%p184) target = $region24
      $region23: #{tpu_custom_call.1} parent=5 // pred_region
        // Predicated region
        $region25: #{tpu_custom_call.1} parent=23 // pred_check
          %p187 = pneg %p57
        $region26: #{tpu_custom_call.1} parent=23 // pred_check_branch
          %189 = sbr.rel (%p187) target = $region28
        $region27: #{tpu_custom_call.1} parent=23 // pred_region
          %s190 = sand.u32 %s47, 1
          %s191 = scalar_lea.sflag [#allocation4], %s190
          %s192 = sand.u32 %s47, 1
          %s193 = smul.addr %s192, 8
          %s194 = scalar_lea.vmem [#allocation3], %s193
          %s196 = ssub.s32 128, 128
          %197 = vsyncadd %s191, %s196
          %s198 = sadd.s32 %s25, %s23
          %s199 = smul.addr %s198, 128
          %s200 = scalar_lea.hbm %s0, %s199
          %s202 = sshll.u32 %s194, 4
          %s203 = int_to_ptr.vmem [resolvable:$true] %s202
          %205 = dma.hbm_to_vmem [thread:$0]  %s200, 128, %s203, %s191
        $region28: #{tpu_custom_call.1} parent=23 // pred_fallthru
          _
      $region24: #{tpu_custom_call.1} parent=5 // pred_fallthru
        _
      %p206 = scmp.le.s32.totalorder 1, %s16
      %p207 = scmp.lt.s32.totalorder %s16, 3
      %p208 = pnand %p206, %p207
      %p209 = pneg %p208
      // Predicated region
      $region29: #{tpu_custom_call.1} parent=5 // pred_check
        _
      $region30: #{tpu_custom_call.1} parent=5 // pred_check_branch
        %211 = sbr.rel (%p208) target = $region32
      $region31: #{tpu_custom_call.1} parent=5 // pred_region
        %s212 = ssub.s32 %s16, 1
        %s213 = sand.u32 %s50, 1
        %s214 = scalar_lea.sflag [#allocation4], %s213
        %s215 = sand.u32 %s50, 1
        %s216 = smul.addr %s215, 8
        %s217 = scalar_lea.vmem [#allocation3], %s216
        // Predicated region
        $region33: #{tpu_custom_call.1} parent=31 // pred_check
          %p218 = pneg %p63
        $region34: #{tpu_custom_call.1} parent=31 // pred_check_branch
          %220 = sbr.rel (%p218) target = $region36
        $region35: #{tpu_custom_call.1} parent=31 // pred_region
          %221 = dma.done %s214, 128
        $region36: #{tpu_custom_call.1} parent=31 // pred_fallthru
          _
        // Predicated region
        $region37: #{tpu_custom_call.1} parent=31 // pred_check
          %p222 = pneg %p91
        $region38: #{tpu_custom_call.1} parent=31 // pred_check_branch
          %224 = sbr.rel (%p222) target = $region40
        $region39: #{tpu_custom_call.1} parent=31 // pred_region
          %225 = dma.done [#allocation7], 512
        $region40: #{tpu_custom_call.1} parent=31 // pred_fallthru
          _
        %s226 = sand.u32 %s50, 1
        %s227 = scalar_lea.sflag [#allocation4], %s226
        %s228 = sand.u32 %s50, 1
        %s229 = smul.addr %s228, 8
        %s230 = scalar_lea.vmem [#allocation3], %s229
        %p231 = pneg %p63
        %p232 = pneg %p60
        %p233 = pneg %p91
        %p234 = pneg %p88
        %p235 = scmp.lt.s32.totalorder %s27, 0
        %s236 = scalar_select %p235, %s27, 0
        %s237 = scalar_lea.vmem %s2, %s236
        %p238 = pneg %p117
        %p239 = pneg %p114
        %p240 = pneg %p145
        %p241 = pneg %p142
        %s242 = sand.u32 %s132, 1
        %s243 = scalar_lea.sflag [#allocation5], %s242
        %s244 = sand.u32 %s132, 1
        %s245 = smul.addr %s244, 8
        %s246 = scalar_lea.vmem [#allocation8], %s245
        %s247 = smul.u32 4, %s28
        %p248 = scmp.lt.s32.totalorder %s27, 0
        %s249 = scalar_select %p248, %s27, 0
        %s250 = scalar_lea.vmem %s2, %s249
        %p252 = scmp.eq.s32.totalorder %s28, 0
        // Predicated region
        $region41: #{tpu_custom_call.1} parent=31 // pred_check
          %p253 = pneg %p252
        $region42: #{tpu_custom_call.1} parent=31 // pred_check_branch
          %255 = sbr.rel (%p253) target = $region44
        $region43: #{tpu_custom_call.1} parent=31 // pred_region
          %vm256 = vcmask 785408
          %257 = vst.msk [vmem:[#allocation2] sm:$0xff] %vm256, 0.0
        $region44: #{tpu_custom_call.1} parent=31 // pred_fallthru
          _
        %v258 = vld [vmem:[#allocation2] sm:$0xff]
        %v259 = vld [vmem:[%s217] sm:$0xff]
        %v260 = vpack.c.bf16 %v259, %v259
        %v261 = vld [vmem:[#allocation6] sm:$0xff]
        %v262 = vld [vmem:[#allocation6 + $0x8] sm:$0xff]
        %v263 = vld [vmem:[#allocation6 + $0x10] sm:$0xff]
        %v264 = vld [vmem:[#allocation6 + $0x18] sm:$0xff]
        %v265 = vpack.c.bf16 %v262, %v261
        %v266 = vpack.c.bf16 %v264, %v263
        %vm267 = vcmask 261120
        %v269 = vsel %vm267, %v260, 0
        %271 = vmatprep.subr.bf16.mxu0 0
        %272 = vmatpush1.bf16.msra.mxu0 0
        %273 = vmatprep.subr.bf16.mxu0 0
        %274 = vmatpush1.bf16.msra.mxu0 0
        %275 = vmatprep.subr.bf16.mxu0 0
        %276 = vmatpush1.bf16.msra.mxu0 0
        %277 = vmatprep.subr.bf16.mxu0 0
        %278 = vmatpush1.bf16.msra.mxu0 0
        %279 = vmatprep.subr.bf16.mxu0 0
        %280 = vmatpush1.bf16.msra.mxu0 0
        %281 = vmatprep.subr.bf16.mxu0 0
        %282 = vmatpush1.bf16.msra.mxu0 0
        %283 = vmatprep.subr.bf16.mxu0 0
        %284 = vmatpush1.bf16.msra.mxu0 %v266
        %285 = vmatprep.subr.bf16.mxu0 0
        %286 = vmatpush1.bf16.msra.mxu0 %v265
        %287 = vmatprep.subr.bf16.mxu0 0
        %288 = vmatpush2.bf16.msra.mxu0 0
        %289 = vmatprep.subr.bf16.mxu0 0
        %290 = vmatpush2.bf16.msra.mxu0 0
        %291 = vmatprep.subr.bf16.mxu0 0
        %292 = vmatpush2.bf16.msra.mxu0 0
        %293 = vmatprep.subr.bf16.mxu0 0
        %294 = vmatpush2.bf16.msra.mxu0 0
        %295 = vmatprep.subr.bf16.mxu0 0
        %296 = vmatpush2.bf16.msra.mxu0 0
        %297 = vmatprep.subr.bf16.mxu0 0
        %298 = vmatpush2.bf16.msra.mxu0 0
        %299 = vmatprep.subr.bf16.mxu0 0
        %300 = vmatpush2.bf16.msra.mxu0 0
        %301 = vmatprep.subr.bf16.mxu0 0
        %302 = vmatpush2.bf16.msra.mxu0 0
        %303 = vmatprep.mubr.bf16.mxu0 0
        %304 = vmatmul.mubr.bf16.gmra.mxu0 %v269
        %v305 = vpop.f32.mrf.mxu0
        %v306 = vadd.f32 0.0, %v305
        %v307 = vpop.f32.mrf.mxu0
        %v308 = vpop.f32.mrf.mxu0
        %v309 = vpop.f32.mrf.mxu0
        %310 = vdwg.mxu0
        %v311 = vadd.f32 %v258, %v306
        %vm312 = vcmask 785408
        %313 = vst.msk [vmem:[#allocation2] sm:$0xff] %vm312, %v311
        // Predicated region
        $region45: #{tpu_custom_call.1} parent=31 // pred_check
          %p314 = pneg %p252
        $region46: #{tpu_custom_call.1} parent=31 // pred_check_branch
          %316 = sbr.rel (%p314) target = $region48
        $region47: #{tpu_custom_call.1} parent=31 // pred_region
          %v317 = vld [vmem:[#allocation2] sm:$0xff]
          %v318 = vld [vmem:[%s250] sm:$0x1]
          %v320 = vlaneseq
          %v321 = vshrl.u32 %v320, 7
          %v322 = vsub.s32 0, %v321
          %v323 = vrot.slane %v318, %v322
          %v325 = vadd.f32 %v317, %v323
          %326 = vst.msk [vmem:[%s246] sm:$0xff] %vm312, %v325
        $region48: #{tpu_custom_call.1} parent=31 // pred_fallthru
          _
        %s327 = sand.u32 %s132, 1
        %s328 = scalar_lea.sflag [#allocation5], %s327
        %s329 = sand.u32 %s132, 1
        %s330 = smul.addr %s329, 8
        %s331 = scalar_lea.vmem [#allocation8], %s330
        // Predicated region
        $region49: #{tpu_custom_call.1} parent=31 // pred_check
          %p332 = pneg %p142
        $region50: #{tpu_custom_call.1} parent=31 // pred_check_branch
          %334 = sbr.rel (%p332) target = $region52
        $region51: #{tpu_custom_call.1} parent=31 // pred_region
          %s336 = ssub.s32 128, 128
          %337 = vsyncadd %s328, %s336
          %s338 = sadd.s32 %s27, %s26
          %s339 = smul.addr %s338, 128
          %s340 = scalar_lea.hbm %s3, %s339
          %s342 = sshll.u32 %s331, 4
          %s343 = int_to_ptr.vmem [resolvable:$true] %s342
          %345 = dma.vmem_to_hbm [thread:$0]  %s343, 128, %s340, %s328
        $region52: #{tpu_custom_call.1} parent=31 // pred_fallthru
          _
      $region32: #{tpu_custom_call.1} parent=5 // pred_fallthru
        _
      %p346 = scmp.le.s32.totalorder 2, %s16
      // Predicated region
      $region53: #{tpu_custom_call.1} parent=5 // pred_check
        %p347 = pneg %p346
      $region54: #{tpu_custom_call.1} parent=5 // pred_check_branch
        %349 = sbr.rel (%p347) target = $region56
      $region55: #{tpu_custom_call.1} parent=5 // pred_region
        %s350 = ssub.s32 %s16, 2
        // Predicated region
        $region57: #{tpu_custom_call.1} parent=55 // pred_check
          %p351 = pneg %p148
        $region58: #{tpu_custom_call.1} parent=55 // pred_check_branch
          %353 = sbr.rel (%p351) target = $region60
        $region59: #{tpu_custom_call.1} parent=55 // pred_region
          %s354 = sand.u32 %s133, 1
          %s355 = scalar_lea.sflag [#allocation5], %s354
          %s356 = sand.u32 %s133, 1
          %s357 = smul.addr %s356, 8
          %s358 = scalar_lea.vmem [#allocation8], %s357
          %359 = dma.done %s355, 128
        $region60: #{tpu_custom_call.1} parent=55 // pred_fallthru
          _
      $region56: #{tpu_custom_call.1} parent=5 // pred_fallthru
        _
    $region6: #{tpu_custom_call.1} parent=1 // loop_footer
      %s20 = sadd.s32 1, %s16
    $region7: #{tpu_custom_call.1} parent=1 // loop_footer_branch
      %15 = sbr.rel target = $region3
    $region8: #{tpu_custom_call.1} parent=1 // loop_exit
      _
    %360 = vsyncpa [#allocation4], 1
    %s361 = scalar_lea.sflag [#allocation4], 1
    %362 = vsyncpa %s361, 1
    %363 = vsyncpa [#allocation7], 1
    %364 = vsyncpa [#allocation5], 1
    %s365 = scalar_lea.sflag [#allocation5], 1
    %366 = vsyncpa %s365, 1

</llo_original>
